<compile_context>
chip_gen: v7x
topology: tpu7x:2x2x1
jax: 0.10.0
libtpu: 0.0.40
codegen_flags: <defaults>
</compile_context>

<pallas_src>
import functools
import math

import jax
import jax.numpy as jnp
from jax import lax
from jax.experimental import pallas as pl
from jax.experimental.pallas import tpu as pltpu

LAYER_NORM_EPS = 1e-12            # LiLT config default
_INV_SQRT2 = 1.0 / math.sqrt(2.0)
_LN_CHUNK = 256                   # max rows of f32 GELU/LN temporaries at once
_ROW_ALIGN = 16                   # bf16 packs 2 rows / sublane -> 16-row alignment


def _round_up(x, m):
    return ((x + m - 1) // m) * m


def _cdiv(a, b):
    return (a + b - 1) // b


def _default_row_tile():
    """Per-generation default row tile (review: v5e ~512, v6e/v7x ~768)."""
    try:
        kind = jax.devices()[0].device_kind.lower()
    except Exception:
        return 512
    if "v5" in kind:
        return 512
    return 768


def _lilt_lm_head_kernel(x_ref, w1_ref, b1_ref, gamma_ref, beta_ref,
                         w2_ref, b2_ref, o_ref, hn_ref, *, n_chunks, chunk):
    """grid = (row tile i [parallel], vocab tile j [arbitrary], innermost)."""

    # mapping_layer + GELU + LayerNorm once per row tile (first vocab tile);
    # result cached in a bf16 VMEM scratch and reused for every vocab tile.
    @pl.when(pl.program_id(1) == 0)
    def _():
        def body(c, carry):
            r0 = pl.multiple_of(c * chunk, chunk)
            xb = x_ref[pl.ds(r0, chunk), :]
            # (chunk, H) @ (H, H) on the MXU: bf16 operands, f32 accumulate.
            h = jnp.dot(xb, w1_ref[...], preferred_element_type=jnp.float32)
            h = h + b1_ref[...].astype(jnp.float32)
            # exact erf GELU (matches transformers' gelu / torch F.gelu)
            h = 0.5 * h * (1.0 + lax.erf(h * _INV_SQRT2))
            # LayerNorm over hidden dim (f32 math, biased var, eps inside rsqrt)
            mu = jnp.mean(h, axis=-1, keepdims=True)
            d = h - mu
            var = jnp.mean(d * d, axis=-1, keepdims=True)
            hn = d * lax.rsqrt(var + LAYER_NORM_EPS)
            hn = (hn * gamma_ref[...].astype(jnp.float32)
                  + beta_ref[...].astype(jnp.float32))
            hn_ref[pl.ds(r0, chunk), :] = hn.astype(hn_ref.dtype)
            return carry

        lax.fori_loop(0, n_chunks, body, 0)

    # lm_head: (tm, H) @ (H, tn) + (1, tn) for the current vocab tile.
    # Scratch is already in the matmul (bf16) dtype -> no per-j cast.
    logits = jnp.dot(hn_ref[...], w2_ref[...],
                     preferred_element_type=jnp.float32)
    logits = logits + b2_ref[...].astype(jnp.float32)
    o_ref[...] = logits.astype(o_ref.dtype)


def lilt_lm_head(output_vectors, w1, b1, gamma, beta, w2, b2,
                 *, tm=None, tn=2048, matmul_dtype=jnp.bfloat16):
    """output_vectors: (B, S, H) -> logits (B, S, V)."""
    B, S, H = output_vectors.shape
    V = w2.shape[1]
    N = B * S
    out_dtype = output_vectors.dtype

    if tm is None:
        tm = _default_row_tile()

    # ---- Row tiling: shrink tm toward the real row count so the last tile
    #      isn't mostly padding; keep the LN sub-chunks 16-row aligned. ----
    n16 = _round_up(N, _ROW_ALIGN)
    num_row_tiles = _cdiv(n16, tm)
    tm = _cdiv(n16, num_row_tiles)
    n_chunks = _cdiv(tm, _LN_CHUNK)
    tm = _round_up(tm, _ROW_ALIGN * n_chunks)
    chunk = tm // n_chunks
    n_pad = tm * num_row_tiles
    # Note: on v7x (2 TCs), megacore shards the "parallel" i axis; keeping
    # num_row_tiles >= 2 for large N happens naturally with tm ~ 768.

    # ---- Vocab tiling: pad V to a multiple of 512 (not of tn), then pick the
    #      largest 128-multiple tn <= requested that divides the padded vocab.
    v_pad = _round_up(V, 512)
    tn = max(128, min((tn // 128) * 128, v_pad))
    while v_pad % tn:
        tn -= 128
    num_vocab_tiles = v_pad // tn

    # ---- Operand prep: bf16 matmul operands; pad rows / vocab with zeros. ----
    x2d = output_vectors.reshape(N, H).astype(matmul_dtype)
    if n_pad != N:
        x2d = jnp.pad(x2d, ((0, n_pad - N), (0, 0)))
    w1_m = w1.astype(matmul_dtype)
    w2_m = w2.astype(matmul_dtype)
    b2_p = b2
    if v_pad != V:
        w2_m = jnp.pad(w2_m, ((0, 0), (0, v_pad - V)))
        b2_p = jnp.pad(b2, ((0, v_pad - V),))

    b1_2d = b1.reshape(1, H)
    gamma_2d = gamma.reshape(1, H)
    beta_2d = beta.reshape(1, H)
    b2_2d = b2_p.reshape(1, v_pad)

    # ---- VMEM budget + cost estimate (w2 streams once per row tile). ----
    mm_sz = jnp.dtype(matmul_dtype).itemsize
    out_sz = jnp.dtype(out_dtype).itemsize
    est_vmem = (2 * tm * H * mm_sz          # x tile (double-buffered)
                + 2 * H * H * mm_sz         # mapping weight
                + 2 * H * tn * mm_sz        # lm_head weight tile
                + 2 * tm * tn * out_sz      # output tile
                + 2 * (3 * H + tn) * 4      # biases / gamma / beta
                + tm * H * mm_sz            # cached post-LN scratch (bf16)
                + 6 * chunk * H * 4)        # f32 GELU/LN temporaries per chunk
    vmem_limit = max(48 * 1024 * 1024,
                     min(int(est_vmem * 1.3), 100 * 1024 * 1024))

    cost = pl.CostEstimate(
        flops=2 * n_pad * H * (H + v_pad),
        transcendentals=n_pad * H,
        bytes_accessed=(n_pad * H * mm_sz                      # x read once
                        + H * H * mm_sz                        # w1 read once
                        + num_row_tiles * H * v_pad * mm_sz    # w2 per row tile
                        + n_pad * v_pad * out_sz),             # logits written
    )

    kernel = functools.partial(_lilt_lm_head_kernel,
                               n_chunks=n_chunks, chunk=chunk)

    out = pl.pallas_call(
        kernel,
        out_shape=jax.ShapeDtypeStruct((n_pad, v_pad), out_dtype),
        grid_spec=pltpu.PrefetchScalarGridSpec(
            num_scalar_prefetch=0,
            grid=(num_row_tiles, num_vocab_tiles),   # vocab axis innermost
            in_specs=[
                pl.BlockSpec((tm, H), lambda i, j: (i, 0)),   # x row tile
                pl.BlockSpec((H, H), lambda i, j: (0, 0)),    # mapping weight
                pl.BlockSpec((1, H), lambda i, j: (0, 0)),    # mapping bias
                pl.BlockSpec((1, H), lambda i, j: (0, 0)),    # LN gamma
                pl.BlockSpec((1, H), lambda i, j: (0, 0)),    # LN beta
                pl.BlockSpec((H, tn), lambda i, j: (0, j)),   # lm_head weight tile
                pl.BlockSpec((1, tn), lambda i, j: (0, j)),   # lm_head (tied) bias
            ],
            out_specs=pl.BlockSpec((tm, tn), lambda i, j: (i, j)),
            scratch_shapes=[pltpu.VMEM((tm, H), matmul_dtype)],  # post-LN cache
        ),
        compiler_params=pltpu.CompilerParams(
            dimension_semantics=("parallel", "arbitrary"),
            vmem_limit_bytes=vmem_limit,
        ),
        cost_estimate=cost,
    )(x2d, w1_m, b1_2d, gamma_2d, beta_2d, w2_m, b2_2d)

    return out[:N, :V].reshape(B, S, V)


def _reference(x, w1, b1, gamma, beta, w2, b2):
    """Pure-f32 reference of the PyTorch forward."""
    h = x.astype(jnp.float32) @ w1 + b1
    h = 0.5 * h * (1.0 + lax.erf(h * jnp.float32(_INV_SQRT2)))
    mu = jnp.mean(h, axis=-1, keepdims=True)
    var = jnp.mean((h - mu) ** 2, axis=-1, keepdims=True)
    hn = (h - mu) * lax.rsqrt(var + LAYER_NORM_EPS)
    hn = hn * gamma + beta
    return hn @ w2 + b2


if __name__ == "__main__":
    # Small synthetic config: hidden=32, vocab=64, batch=2, seq=8.
    B, S, H, V = 2, 8, 32, 64

    key = jax.random.PRNGKey(0)
    kx, kw1, kb1, kg, kbeta, kw2 = jax.random.split(key, 6)

    x = jax.random.normal(kx, (B, S, H), dtype=jnp.float32)

    # Deterministic parameter init (synthetic; mirrors module shapes).
    w1 = jax.random.normal(kw1, (H, H), dtype=jnp.float32) * 0.02    # mapping_layer.weight^T
    b1 = jax.random.normal(kb1, (H,), dtype=jnp.float32) * 0.02      # mapping_layer.bias
    gamma = jnp.ones((H,), dtype=jnp.float32)                        # norm_layer.weight
    beta = jnp.zeros((H,), dtype=jnp.float32)                        # norm_layer.bias
    w2 = jax.random.normal(kw2, (H, V), dtype=jnp.float32) * 0.02    # lm_head.weight^T
    b2 = jnp.zeros((V,), dtype=jnp.float32)                          # tied self.bias (zeros)

    logits = lilt_lm_head(x, w1, b1, gamma, beta, w2, b2)
    logits = jax.block_until_ready(logits)
    assert logits.shape == (B, S, V)

    ref = _reference(x.reshape(B * S, H), w1, b1, gamma, beta, w2, b2)
    ref = ref.reshape(B, S, V)
    # Tolerance re-baselined for bf16 matmul operands (f32 accumulation).
    assert jnp.allclose(logits, ref, atol=2e-2, rtol=2e-2), (
        "mismatch vs reference: max abs err = "
        f"{float(jnp.max(jnp.abs(logits - ref)))}")

    print("KERNEL_OK")
</pallas_src>

<mosaic_0001>
module attributes {stable_mosaic.version = 11 : i64} {
  func.func @_lilt_lm_head_kernel(%arg0: i32, %arg1: i32, %arg2: memref<16x32xbf16, #tpu.memory_space<vmem>>, %arg3: memref<32x32xbf16, #tpu.memory_space<vmem>>, %arg4: memref<1x32xf32, #tpu.memory_space<vmem>>, %arg5: memref<1x32xf32, #tpu.memory_space<vmem>>, %arg6: memref<1x32xf32, #tpu.memory_space<vmem>>, %arg7: memref<32x512xbf16, #tpu.memory_space<vmem>>, %arg8: memref<1x512xf32, #tpu.memory_space<vmem>>, %arg9: memref<16x512xf32, #tpu.memory_space<vmem>>, %arg10: memref<16x32xbf16, #tpu.memory_space<vmem>>) attributes {dimension_semantics = [#tpu.dimension_semantics<parallel>, #tpu.dimension_semantics<arbitrary>], iteration_bounds = array<i64: 1, 1>, scalar_prefetch = 0 : i64, scratch_operands = 1 : i64, tpu.core_type = #tpu.core_type<tc>, window_params = [{transform_indices = @transform_0, window_bounds = array<i64: 16, 32>}, {pipeline_mode = #tpu.pipeline_mode<synchronous>, transform_indices = @transform_1, window_bounds = array<i64: 32, 32>}, {pipeline_mode = #tpu.pipeline_mode<synchronous>, transform_indices = @transform_2, window_bounds = array<i64: 1, 32>}, {pipeline_mode = #tpu.pipeline_mode<synchronous>, transform_indices = @transform_3, window_bounds = array<i64: 1, 32>}, {pipeline_mode = #tpu.pipeline_mode<synchronous>, transform_indices = @transform_4, window_bounds = array<i64: 1, 32>}, {transform_indices = @transform_5, window_bounds = array<i64: 32, 512>}, {transform_indices = @transform_6, window_bounds = array<i64: 1, 512>}, {transform_indices = @transform_7, window_bounds = array<i64: 16, 512>}]} {
    %c0_i32 = arith.constant 0 : i32
    %0 = arith.cmpi eq, %arg1, %c0_i32 : i32
    %1 = arith.extui %0 : i1 to i32
    %c0_i32_0 = arith.constant 0 : i32
    %2 = arith.cmpi ne, %1, %c0_i32_0 : i32
    scf.if %2 {
      %c0_i32_8 = arith.constant 0 : i32
      %c16_i32 = arith.constant 16 : i32
      %10 = arith.muli %c0_i32_8, %c16_i32 : i32
      %11 = tpu.assume_multiple %10, 16 : i32
      %12 = arith.index_cast %11 : i32 to index
      %c0_9 = arith.constant 0 : index
      %13 = vector.load %arg2[%12, %c0_9] : memref<16x32xbf16, #tpu.memory_space<vmem>>, vector<16x32xbf16>
      %c0_10 = arith.constant 0 : index
      %c0_11 = arith.constant 0 : index
      %14 = vector.load %arg3[%c0_10, %c0_11] : memref<32x32xbf16, #tpu.memory_space<vmem>>, vector<32x32xbf16>
      %cst_12 = arith.constant dense<0.000000e+00> : vector<16x32xf32>
      %15 = tpu.matmul %13, %14, %cst_12 {dimension_numbers = #tpu.dot_dimension_numbers<[1], [0], [0], [1], [0, 0, 1, 1], [], []>} : vector<16x32xbf16>, vector<32x32xbf16>, vector<16x32xf32> -> vector<16x32xf32>
      %c0_13 = arith.constant 0 : index
      %c0_14 = arith.constant 0 : index
      %16 = vector.load %arg4[%c0_13, %c0_14] : memref<1x32xf32, #tpu.memory_space<vmem>>, vector<1x32xf32>
      %17 = vector.broadcast %16 : vector<1x32xf32> to vector<16x32xf32>
      %18 = arith.addf %15, %17 : vector<16x32xf32>
      %cst_15 = arith.constant 5.000000e-01 : f32
      %19 = vector.broadcast %cst_15 : f32 to vector<16x32xf32>
      %20 = arith.mulf %19, %18 : vector<16x32xf32>
      %cst_16 = arith.constant 0.707106769 : f32
      %21 = vector.broadcast %cst_16 : f32 to vector<16x32xf32>
      %22 = arith.mulf %18, %21 : vector<16x32xf32>
      %23 = math.erf %22 : vector<16x32xf32>
      %cst_17 = arith.constant 1.000000e+00 : f32
      %24 = vector.broadcast %cst_17 : f32 to vector<16x32xf32>
      %25 = arith.addf %24, %23 : vector<16x32xf32>
      %26 = arith.mulf %20, %25 : vector<16x32xf32>
      %cst_18 = arith.constant dense<0.000000e+00> : vector<16xf32>
      %27 = vector.multi_reduction <add>, %26, %cst_18 [1] : vector<16x32xf32> to vector<16xf32>
      %28 = vector.shape_cast %27 : vector<16xf32> to vector<16x1xf32>
      %cst_19 = arith.constant 3.200000e+01 : f32
      %29 = vector.broadcast %cst_19 : f32 to vector<16x1xf32>
      %30 = arith.divf %28, %29 : vector<16x1xf32>
      %31 = vector.broadcast %30 : vector<16x1xf32> to vector<16x32xf32>
      %32 = arith.subf %26, %31 : vector<16x32xf32>
      %33 = arith.mulf %32, %32 : vector<16x32xf32>
      %cst_20 = arith.constant dense<0.000000e+00> : vector<16xf32>
      %34 = vector.multi_reduction <add>, %33, %cst_20 [1] : vector<16x32xf32> to vector<16xf32>
      %35 = vector.shape_cast %34 : vector<16xf32> to vector<16x1xf32>
      %cst_21 = arith.constant 3.200000e+01 : f32
      %36 = vector.broadcast %cst_21 : f32 to vector<16x1xf32>
      %37 = arith.divf %35, %36 : vector<16x1xf32>
      %cst_22 = arith.constant 9.99999996E-13 : f32
      %38 = vector.broadcast %cst_22 : f32 to vector<16x1xf32>
      %39 = arith.addf %37, %38 : vector<16x1xf32>
      %40 = math.rsqrt %39 : vector<16x1xf32>
      %41 = vector.broadcast %40 : vector<16x1xf32> to vector<16x32xf32>
      %42 = arith.mulf %32, %41 : vector<16x32xf32>
      %c0_23 = arith.constant 0 : index
      %c0_24 = arith.constant 0 : index
      %43 = vector.load %arg5[%c0_23, %c0_24] : memref<1x32xf32, #tpu.memory_space<vmem>>, vector<1x32xf32>
      %44 = vector.broadcast %43 : vector<1x32xf32> to vector<16x32xf32>
      %45 = arith.mulf %42, %44 : vector<16x32xf32>
      %c0_25 = arith.constant 0 : index
      %c0_26 = arith.constant 0 : index
      %46 = vector.load %arg6[%c0_25, %c0_26] : memref<1x32xf32, #tpu.memory_space<vmem>>, vector<1x32xf32>
      %47 = vector.broadcast %46 : vector<1x32xf32> to vector<16x32xf32>
      %48 = arith.addf %45, %47 : vector<16x32xf32>
      %49 = arith.truncf %48 : vector<16x32xf32> to vector<16x32xbf16>
      %50 = arith.index_cast %11 : i32 to index
      %c0_27 = arith.constant 0 : index
      %51 = vector.load %arg10[%50, %c0_27] : memref<16x32xbf16, #tpu.memory_space<vmem>>, vector<16x32xbf16>
      tpu.vector_store %arg10[%50, %c0_27], %49 {strides = array<i32>} : memref<16x32xbf16, #tpu.memory_space<vmem>>, vector<16x32xbf16>,
      %c1_i32 = arith.constant 1 : i32
    } else {
    }
    %c0 = arith.constant 0 : index
    %c0_1 = arith.constant 0 : index
    %3 = vector.load %arg10[%c0, %c0_1] : memref<16x32xbf16, #tpu.memory_space<vmem>>, vector<16x32xbf16>
    %c0_2 = arith.constant 0 : index
    %c0_3 = arith.constant 0 : index
    %4 = vector.load %arg7[%c0_2, %c0_3] : memref<32x512xbf16, #tpu.memory_space<vmem>>, vector<32x512xbf16>
    %cst = arith.constant dense<0.000000e+00> : vector<16x512xf32>
    %5 = tpu.matmul %3, %4, %cst {dimension_numbers = #tpu.dot_dimension_numbers<[1], [0], [0], [1], [0, 0, 1, 1], [], []>} : vector<16x32xbf16>, vector<32x512xbf16>, vector<16x512xf32> -> vector<16x512xf32>
    %c0_4 = arith.constant 0 : index
    %c0_5 = arith.constant 0 : index
    %6 = vector.load %arg8[%c0_4, %c0_5] : memref<1x512xf32, #tpu.memory_space<vmem>>, vector<1x512xf32>
    %7 = vector.broadcast %6 : vector<1x512xf32> to vector<16x512xf32>
    %8 = arith.addf %5, %7 : vector<16x512xf32>
    %c0_6 = arith.constant 0 : index
    %c0_7 = arith.constant 0 : index
    %9 = vector.load %arg9[%c0_6, %c0_7] : memref<16x512xf32, #tpu.memory_space<vmem>>, vector<16x512xf32>
    tpu.vector_store %arg9[%c0_6, %c0_7], %8 {strides = array<i32>} : memref<16x512xf32, #tpu.memory_space<vmem>>, vector<16x512xf32>,
    return
  }
  func.func @transform_0(%arg0: i32, %arg1: i32) -> (i32, i32) {
    %c0_i32 = arith.constant 0 : i32
    %c0_i32_0 = arith.constant 0 : i32
    return %arg0, %c0_i32 : i32, i32
  }
  func.func @transform_1(%arg0: i32, %arg1: i32) -> (i32, i32) {
    %c0_i32 = arith.constant 0 : i32
    %c0_i32_0 = arith.constant 0 : i32
    %c0_i32_1 = arith.constant 0 : i32
    return %c0_i32, %c0_i32_0 : i32, i32
  }
  func.func @transform_2(%arg0: i32, %arg1: i32) -> (i32, i32) {
    %c0_i32 = arith.constant 0 : i32
    %c0_i32_0 = arith.constant 0 : i32
    %c0_i32_1 = arith.constant 0 : i32
    return %c0_i32, %c0_i32_0 : i32, i32
  }
  func.func @transform_3(%arg0: i32, %arg1: i32) -> (i32, i32) {
    %c0_i32 = arith.constant 0 : i32
    %c0_i32_0 = arith.constant 0 : i32
    %c0_i32_1 = arith.constant 0 : i32
    return %c0_i32, %c0_i32_0 : i32, i32
  }
  func.func @transform_4(%arg0: i32, %arg1: i32) -> (i32, i32) {
    %c0_i32 = arith.constant 0 : i32
    %c0_i32_0 = arith.constant 0 : i32
    %c0_i32_1 = arith.constant 0 : i32
    return %c0_i32, %c0_i32_0 : i32, i32
  }
  func.func @transform_5(%arg0: i32, %arg1: i32) -> (i32, i32) {
    %c0_i32 = arith.constant 0 : i32
    %c0_i32_0 = arith.constant 0 : i32
    return %c0_i32, %arg1 : i32, i32
  }
  func.func @transform_6(%arg0: i32, %arg1: i32) -> (i32, i32) {
    %c0_i32 = arith.constant 0 : i32
    %c0_i32_0 = arith.constant 0 : i32
    return %c0_i32, %arg1 : i32, i32
  }
  func.func @transform_7(%arg0: i32, %arg1: i32) -> (i32, i32) {
    %c0_i32 = arith.constant 0 : i32
    return %arg0, %arg1 : i32, i32
  }
}

</mosaic_0001>

<llo_original>
// kernel: tpu_custom_call.1
$region0: #{tpu_custom_call.1}
  #allocation0 [shape = 'u32[]', space=smem, size = 0x4, offset = 0x4, fixed_abs, tag = 'smem constant byte address 0x4 - core index']
  #allocation1 [shape = 'u32[144,128]{1,0:T(1,128)}', space=vmem, size = 0x12000, scoped, tag = 'internal scratch']
  #allocation2 [shape = 'bf16[16,32]{1,0:T(16,128)(2,1)}', space=vmem, size = 0x1000, scoped, tag = 'scratch operand']
  %s0 = inlined_call_operand.hbm [shape: bf16[16,32], index: 0, kind: input, shape index: {}]
  %s1 = inlined_call_operand.hbm [shape: bf16[32,32], index: 1, kind: input, shape index: {}]
  %s2 = inlined_call_operand.vmem [shape: f32[1,32], index: 2, kind: input, shape index: {}]
  %s3 = inlined_call_operand.vmem [shape: f32[1,32], index: 3, kind: input, shape index: {}]
  %s4 = inlined_call_operand.vmem [shape: f32[1,32], index: 4, kind: input, shape index: {}]
  %s5 = inlined_call_operand.hbm [shape: bf16[32,512], index: 5, kind: input, shape index: {}]
  %s6 = inlined_call_operand.vmem [shape: f32[1,512], index: 6, kind: input, shape index: {}]
  %s7 = inlined_call_operand.hbm [shape: f32[16,512], index: 7, kind: output, shape index: {}]
  %s8 = sld [smem:[#allocation0]]
  $region54: #{tpu_custom_call.1} parent=0
    _
  %s10 = ssub.s32 1, %s8
  %s11 = scalar_select 0, %s10, %s8
  $region1: #{tpu_custom_call.1} parent=0
    #allocation3 [shape = 'u8[4096]{0}', space=vmem, size = 0x1000, scoped, tag = 'input window, operand 0, single buffered']
    #allocation4 [shape = 's32[1]{0}', space=sflag, size = 0x4, scoped, tag = 'scoped memory for tpu_custom_call.1']
    #allocation5 [shape = 's32[1]{0}', space=sflag, size = 0x4, scoped, tag = 'scoped memory for tpu_custom_call.1']
    #allocation6 [shape = 'u8[8192]{0}', space=vmem, size = 0x2000, scoped, tag = 'input window, operand 1, single buffered']
    #allocation7 [shape = 's32[1]{0}', space=sflag, size = 0x4, scoped, tag = 'scoped memory for tpu_custom_call.1']
    #allocation8 [shape = 'u8[32768]{0}', space=vmem, size = 0x8000, scoped, tag = 'input window, operand 5, single buffered']
    #allocation9 [shape = 'u8[32768]{0}', space=vmem, size = 0x8000, scoped, tag = 'output window, operand 0, single buffered']
    %12 = vsyncpa [#allocation4], 0
    %13 = vsyncpa [#allocation7], 0
    %14 = vsyncpa [#allocation5], 0
    // Predicated region
    $region2: #{tpu_custom_call.1} parent=1 // pred_check
      _
    $region3: #{tpu_custom_call.1} parent=1 // pred_check_branch
      %16 = sbr.rel (0) target = $region5
    $region4: #{tpu_custom_call.1} parent=1 // pred_region
      %s18 = ssub.s32 128, 128
      %19 = vsyncadd [#allocation4], %s18
      %s20 = sshll.u32 [#allocation3], 4
      %s21 = int_to_ptr.vmem [resolvable:$true] %s20
      %26 = dma.hbm_to_vmem [thread:$0]  %s0, 128, %s21, [#allocation4], 64, 64, 4
    $region5: #{tpu_custom_call.1} parent=1 // pred_fallthru
      _
    // Predicated region
    $region6: #{tpu_custom_call.1} parent=1 // pred_check
      _
    $region7: #{tpu_custom_call.1} parent=1 // pred_check_branch
      %28 = sbr.rel (0) target = $region9
    $region8: #{tpu_custom_call.1} parent=1 // pred_region
      %s30 = ssub.s32 256, 256
      %31 = vsyncadd [#allocation7], %s30
      %s32 = sshll.u32 [#allocation6], 4
      %s33 = int_to_ptr.vmem [resolvable:$true] %s32
      %38 = dma.hbm_to_vmem [thread:$0]  %s1, 256, %s33, [#allocation7], 64, 64, 4
    $region9: #{tpu_custom_call.1} parent=1 // pred_fallthru
      _
    // Predicated region
    $region10: #{tpu_custom_call.1} parent=1 // pred_check
      _
    $region11: #{tpu_custom_call.1} parent=1 // pred_check_branch
      %40 = sbr.rel (0) target = $region13
    $region12: #{tpu_custom_call.1} parent=1 // pred_region
      _
    $region13: #{tpu_custom_call.1} parent=1 // pred_fallthru
      _
    // Predicated region
    $region14: #{tpu_custom_call.1} parent=1 // pred_check
      _
    $region15: #{tpu_custom_call.1} parent=1 // pred_check_branch
      %42 = sbr.rel (0) target = $region17
    $region16: #{tpu_custom_call.1} parent=1 // pred_region
      _
    $region17: #{tpu_custom_call.1} parent=1 // pred_fallthru
      _
    // Predicated region
    $region18: #{tpu_custom_call.1} parent=1 // pred_check
      _
    $region19: #{tpu_custom_call.1} parent=1 // pred_check_branch
      %44 = sbr.rel (0) target = $region21
    $region20: #{tpu_custom_call.1} parent=1 // pred_region
      _
    $region21: #{tpu_custom_call.1} parent=1 // pred_fallthru
      _
    // Predicated region
    $region22: #{tpu_custom_call.1} parent=1 // pred_check
      _
    $region23: #{tpu_custom_call.1} parent=1 // pred_check_branch
      %46 = sbr.rel (0) target = $region25
    $region24: #{tpu_custom_call.1} parent=1 // pred_region
      %s48 = ssub.s32 1024, 1024
      %49 = vsyncadd [#allocation7], %s48
      %s50 = sshll.u32 [#allocation8], 4
      %s51 = int_to_ptr.vmem [resolvable:$true] %s50
      %56 = dma.hbm_to_vmem [thread:$0]  %s5, 1024, %s51, [#allocation7], 256, 256, 16
    $region25: #{tpu_custom_call.1} parent=1 // pred_fallthru
      _
    // Predicated region
    $region26: #{tpu_custom_call.1} parent=1 // pred_check
      _
    $region27: #{tpu_custom_call.1} parent=1 // pred_check_branch
      %58 = sbr.rel (0) target = $region29
    $region28: #{tpu_custom_call.1} parent=1 // pred_region
      _
    $region29: #{tpu_custom_call.1} parent=1 // pred_fallthru
      _
    // Predicated region
    $region30: #{tpu_custom_call.1} parent=1 // pred_check
      _
    $region31: #{tpu_custom_call.1} parent=1 // pred_check_branch
      %60 = sbr.rel (0) target = $region33
    $region32: #{tpu_custom_call.1} parent=1 // pred_region
      %61 = dma.done [#allocation4], 128
    $region33: #{tpu_custom_call.1} parent=1 // pred_fallthru
      _
    // Predicated region
    $region34: #{tpu_custom_call.1} parent=1 // pred_check
      _
    $region35: #{tpu_custom_call.1} parent=1 // pred_check_branch
      %63 = sbr.rel (0) target = $region37
    $region36: #{tpu_custom_call.1} parent=1 // pred_region
      %64 = dma.done [#allocation7], 256
    $region37: #{tpu_custom_call.1} parent=1 // pred_fallthru
      _
    // Predicated region
    $region38: #{tpu_custom_call.1} parent=1 // pred_check
      _
    $region39: #{tpu_custom_call.1} parent=1 // pred_check_branch
      %66 = sbr.rel (0) target = $region41
    $region40: #{tpu_custom_call.1} parent=1 // pred_region
      %67 = dma.done [#allocation7], 1024
    $region41: #{tpu_custom_call.1} parent=1 // pred_fallthru
      _
    %p69 = scmp.eq.s32.totalorder 0, 0
    // Predicated region
    $region42: #{tpu_custom_call.1} parent=1 // pred_check
      %p70 = pneg %p69
    $region43: #{tpu_custom_call.1} parent=1 // pred_check_branch
      %72 = sbr.rel (%p70) target = $region45
    $region44: #{tpu_custom_call.1} parent=1 // pred_region
      %v73 = vld [vmem:[#allocation3] sm:$0xf]
      %v74 = vld [vmem:[#allocation3 + $0x4] sm:$0xf]
      %v75 = vld [vmem:[#allocation6] sm:$0xf]
      %v76 = vld [vmem:[#allocation6 + $0x4] sm:$0xf]
      %v77 = vld [vmem:[#allocation6 + $0x8] sm:$0xf]
      %v78 = vld [vmem:[#allocation6 + $0xc] sm:$0xf]
      %v79 = vld [vmem:[%s2] sm:$0x1]
      %v81 = vlaneseq
      %v82 = vshrl.u32 %v81, 7
      %v83 = vsub.s32 0, %v82
      %v84 = vrot.slane %v79, %v83
      %v88 = vunpack.c.l.b16 %v73
      %v89 = vunpack.c.l.b16 %v74
      %v90 = vpack.c.b16 %v89, %v88
      %v95 = vunpack.c.l.b16 %v75
      %v96 = vunpack.c.l.b16 %v76
      %v97 = vunpack.c.l.b16 %v77
      %v98 = vunpack.c.l.b16 %v78
      %v99 = vpack.c.b16 %v96, %v95
      %v100 = vpack.c.b16 %v98, %v97
      %vm103 = vcmask 261120
      %v105 = vsel %vm103, %v90, 0
      %107 = vmatprep.subr.bf16.mxu0 0
      %108 = vmatpush1.bf16.msra.mxu0 %v99
      %109 = vmatprep.subr.bf16.mxu0 0
      %110 = vmatpush1.bf16.msra.mxu0 %v100
      %111 = vmatprep.subr.bf16.mxu0 0
      %112 = vmatpush1.bf16.msra.mxu0 0
      %113 = vmatprep.subr.bf16.mxu0 0
      %114 = vmatpush1.bf16.msra.mxu0 0
      %115 = vmatprep.subr.bf16.mxu0 0
      %116 = vmatpush1.bf16.msra.mxu0 0
      %117 = vmatprep.subr.bf16.mxu0 0
      %118 = vmatpush1.bf16.msra.mxu0 0
      %119 = vmatprep.subr.bf16.mxu0 0
      %120 = vmatpush1.bf16.msra.mxu0 0
      %121 = vmatprep.subr.bf16.mxu0 0
      %122 = vmatpush1.bf16.msra.mxu0 0
      %123 = vmatprep.subr.bf16.mxu0 0
      %124 = vmatpush1.bf16.msra.mxu0 0
      %125 = vmatprep.subr.bf16.mxu0 0
      %126 = vmatpush1.bf16.msra.mxu0 0
      %127 = vmatprep.subr.bf16.mxu0 0
      %128 = vmatpush1.bf16.msra.mxu0 0
      %129 = vmatprep.subr.bf16.mxu0 0
      %130 = vmatpush1.bf16.msra.mxu0 0
      %131 = vmatprep.subr.bf16.mxu0 0
      %132 = vmatpush1.bf16.msra.mxu0 0
      %133 = vmatprep.subr.bf16.mxu0 0
      %134 = vmatpush1.bf16.msra.mxu0 0
      %135 = vmatprep.subr.bf16.mxu0 0
      %136 = vmatpush1.bf16.msra.mxu0 0
      %137 = vmatprep.subr.bf16.mxu0 0
      %138 = vmatpush1.bf16.msra.mxu0 0
      %139 = vmatprep.mubr.bf16.mxu0 0
      %140 = vmatmul.mubr.bf16.gmra.mrb[0].mxu0 %v105
      %v141 = vpop.f32.mrb[0].mxu0
      %v142 = vadd.f32 %v84, %v141
      %v143 = vpop.f32.mrb[0].mxu0
      %v144 = vpop.f32.mrb[0].mxu0
      %v145 = vadd.f32 %v84, %v144
      %v146 = vpop.f32.mrb[0].mxu0
      %147 = vdwg.mxu0
      %v148 = vmul.f32 %v142, 0.5
      %v149 = vmul.f32 %v145, 0.5
      %v150 = vmul.f32 %v142, 0.70710677
      %v151 = vmul.f32 %v145, 0.70710677
      %v152 = verf.f32.pop %v150
      %v153 = verf.f32.pop %v151
      %v154 = vadd.f32 %v152, 1.0
      %v155 = vadd.f32 %v153, 1.0
      %v156 = vmul.f32 %v148, %v154
      %v157 = vmul.f32 %v149, %v155
      %v158 = vsel %vm103, %v156, 0.0
      %159 = vadd.xlane.f32.xlu0 %v158
      %v160 = vpop.xlane.xlu0 %159
      %v161 = vsel %vm103, %v157, 0.0
      %162 = vadd.xlane.f32.xlu0 %v161
      %v163 = vpop.xlane.xlu0 %162
      %v164 = vrcp.pop 32.0
      %v165 = vmul.f32 %v160, %v164
      %v166 = vmul.f32 %v163, %v164
      %v167 = vsub.f32 %v156, %v165
      %v168 = vsub.f32 %v157, %v166
      %v169 = vmul.f32 %v167, %v167
      %v170 = vmul.f32 %v168, %v168
      %v171 = vsel %vm103, %v169, 0.0
      %172 = vadd.xlane.f32.xlu0 %v171
      %v173 = vpop.xlane.xlu0 %172
      %v174 = vsel %vm103, %v170, 0.0
      %175 = vadd.xlane.f32.xlu0 %v174
      %v176 = vpop.xlane.xlu0 %175
      %v177 = vmul.f32 %v173, %v164
      %v178 = vmul.f32 %v176, %v164
      %v179 = vadd.f32 %v177, 1e-12
      %v180 = vadd.f32 %v178, 1e-12
      %v181 = vrsqrt.pop %v179
      %v182 = vrsqrt.pop %v180
      %v183 = vmul.f32 %v167, %v181
      %v184 = vmul.f32 %v168, %v182
      %v185 = vld [vmem:[%s3] sm:$0x1]
      %v187 = vlaneseq
      %v188 = vshrl.u32 %v187, 7
      %v189 = vsub.s32 0, %v188
      %v190 = vrot.slane %v185, %v189
      %v192 = vmul.f32 %v183, %v190
      %v193 = vmul.f32 %v184, %v190
      %v194 = vld [vmem:[%s4] sm:$0x1]
      %v196 = vlaneseq
      %v197 = vshrl.u32 %v196, 7
      %v198 = vsub.s32 0, %v197
      %v199 = vrot.slane %v194, %v198
      %v201 = vadd.f32 %v192, %v199
      %v202 = vadd.f32 %v193, %v199
      %v203 = vpack.c.bf16 %v202, %v201
      %204 = vst.msk [vmem:[#allocation2] sm:$0xff] %vm103, %v203
    $region45: #{tpu_custom_call.1} parent=1 // pred_fallthru
      _
    %v205 = vld [vmem:[#allocation2] sm:$0xff]
    %v206 = vld [vmem:[#allocation8] sm:$0xff]
    %v207 = vld [vmem:[#allocation8 + $0x8] sm:$0xff]
    %v208 = vld [vmem:[#allocation8 + $0x10] sm:$0xff]
    %v209 = vld [vmem:[#allocation8 + $0x18] sm:$0xff]
    %v210 = vld [vmem:[#allocation8 + $0x20] sm:$0xff]
    %v211 = vld [vmem:[#allocation8 + $0x28] sm:$0xff]
    %v212 = vld [vmem:[#allocation8 + $0x30] sm:$0xff]
    %v213 = vld [vmem:[#allocation8 + $0x38] sm:$0xff]
    %v214 = vld [vmem:[%s6] sm:$0xf]
    %v216 = vlaneseq
    %v217 = vshrl.u32 %v216, 7
    %v218 = vsub.s32 0, %v217
    %v219 = vrot.slane %v214, %v218
    %v220 = vlaneseq
    %v221 = vshrl.u32 %v220, 7
    %v222 = vsub.s32 1, %v221
    %v223 = vrot.slane %v214, %v222
    %v224 = vlaneseq
    %v225 = vshrl.u32 %v224, 7
    %v226 = vsub.s32 2, %v225
    %v227 = vrot.slane %v214, %v226
    %v228 = vlaneseq
    %v229 = vshrl.u32 %v228, 7
    %v230 = vsub.s32 3, %v229
    %v231 = vrot.slane %v214, %v230
    %v244 = vunpack.c.l.b16 %v206
    %v245 = vunpack.c.h.b16 %v206
    %v246 = vunpack.c.l.b16 %v207
    %v247 = vunpack.c.h.b16 %v207
    %v248 = vunpack.c.l.b16 %v208
    %v249 = vunpack.c.h.b16 %v208
    %v250 = vunpack.c.l.b16 %v209
    %v251 = vunpack.c.h.b16 %v209
    %v252 = vunpack.c.l.b16 %v210
    %v253 = vunpack.c.h.b16 %v210
    %v254 = vunpack.c.l.b16 %v211
    %v255 = vunpack.c.h.b16 %v211
    %v256 = vunpack.c.l.b16 %v212
    %v257 = vunpack.c.h.b16 %v212
    %v258 = vunpack.c.l.b16 %v213
    %v259 = vunpack.c.h.b16 %v213
    %v260 = vpack.c.b16 %v248, %v244
    %v261 = vpack.c.b16 %v249, %v245
    %v262 = vpack.c.b16 %v250, %v246
    %v263 = vpack.c.b16 %v251, %v247
    %v264 = vpack.c.b16 %v256, %v252
    %v265 = vpack.c.b16 %v257, %v253
    %v266 = vpack.c.b16 %v258, %v254
    %v267 = vpack.c.b16 %v259, %v255
    %vm276 = vcmask 261120
    %v278 = vsel %vm276, %v205, 0
    %280 = vmatprep.subr.bf16.mxu0 %v261
    %281 = vmatpush1.bf16.msra.mxu0 %v260
    %282 = vmatprep.subr.bf16.mxu0 %v265
    %283 = vmatpush1.bf16.msra.mxu0 %v264
    %284 = vmatprep.subr.bf16.mxu0 0
    %285 = vmatpush1.bf16.msra.mxu0 0
    %286 = vmatprep.subr.bf16.mxu0 0
    %287 = vmatpush1.bf16.msra.mxu0 0
    %288 = vmatprep.subr.bf16.mxu0 0
    %289 = vmatpush1.bf16.msra.mxu0 0
    %290 = vmatprep.subr.bf16.mxu0 0
    %291 = vmatpush1.bf16.msra.mxu0 0
    %292 = vmatprep.subr.bf16.mxu0 0
    %293 = vmatpush1.bf16.msra.mxu0 0
    %294 = vmatprep.subr.bf16.mxu0 0
    %295 = vmatpush1.bf16.msra.mxu0 0
    %296 = vmatprep.subr.bf16.mxu0 0
    %297 = vmatpush1.bf16.msra.mxu0 0
    %298 = vmatprep.subr.bf16.mxu0 0
    %299 = vmatpush1.bf16.msra.mxu0 0
    %300 = vmatprep.subr.bf16.mxu0 0
    %301 = vmatpush1.bf16.msra.mxu0 0
    %302 = vmatprep.subr.bf16.mxu0 0
    %303 = vmatpush1.bf16.msra.mxu0 0
    %304 = vmatprep.subr.bf16.mxu0 0
    %305 = vmatpush1.bf16.msra.mxu0 0
    %306 = vmatprep.subr.bf16.mxu0 0
    %307 = vmatpush1.bf16.msra.mxu0 0
    %308 = vmatprep.subr.bf16.mxu0 0
    %309 = vmatpush1.bf16.msra.mxu0 0
    %310 = vmatprep.subr.bf16.mxu0 0
    %311 = vmatpush1.bf16.msra.mxu0 0
    %312 = vmatprep.mubr.bf16.mxu0 0
    %313 = vmatmul.mubr.bf16.gmra.mrb[0].mxu0 %v278
    %v314 = vpop.f32.mrb[0].mxu0
    %v315 = vadd.f32 %v219, %v314
    %v316 = vpop.f32.mrb[0].mxu0
    %v317 = vadd.f32 %v223, %v316
    %v318 = vpop.f32.mrb[0].mxu0
    %v319 = vadd.f32 %v219, %v318
    %v320 = vpop.f32.mrb[0].mxu0
    %v321 = vadd.f32 %v223, %v320
    %322 = vdwg.mxu0
    %323 = vmatprep.subr.bf16.mxu0 %v263
    %324 = vmatpush1.bf16.msra.mxu0 %v262
    %325 = vmatprep.subr.bf16.mxu0 %v267
    %326 = vmatpush1.bf16.msra.mxu0 %v266
    %327 = vmatprep.subr.bf16.mxu0 0
    %328 = vmatpush1.bf16.msra.mxu0 0
    %329 = vmatprep.subr.bf16.mxu0 0
    %330 = vmatpush1.bf16.msra.mxu0 0
    %331 = vmatprep.subr.bf16.mxu0 0
    %332 = vmatpush1.bf16.msra.mxu0 0
    %333 = vmatprep.subr.bf16.mxu0 0
    %334 = vmatpush1.bf16.msra.mxu0 0
    %335 = vmatprep.subr.bf16.mxu0 0
    %336 = vmatpush1.bf16.msra.mxu0 0
    %337 = vmatprep.subr.bf16.mxu0 0
    %338 = vmatpush1.bf16.msra.mxu0 0
    %339 = vmatprep.subr.bf16.mxu0 0
    %340 = vmatpush1.bf16.msra.mxu0 0
    %341 = vmatprep.subr.bf16.mxu0 0
    %342 = vmatpush1.bf16.msra.mxu0 0
    %343 = vmatprep.subr.bf16.mxu0 0
    %344 = vmatpush1.bf16.msra.mxu0 0
    %345 = vmatprep.subr.bf16.mxu0 0
    %346 = vmatpush1.bf16.msra.mxu0 0
    %347 = vmatprep.subr.bf16.mxu0 0
    %348 = vmatpush1.bf16.msra.mxu0 0
    %349 = vmatprep.subr.bf16.mxu0 0
    %350 = vmatpush1.bf16.msra.mxu0 0
    %351 = vmatprep.subr.bf16.mxu0 0
    %352 = vmatpush1.bf16.msra.mxu0 0
    %353 = vmatprep.subr.bf16.mxu0 0
    %354 = vmatpush1.bf16.msra.mxu0 0
    %355 = vmatprep.mubr.bf16.mxu0 0
    %356 = vmatmul.mubr.bf16.gmra.mrb[0].mxu0 %v278
    %v357 = vpop.f32.mrb[0].mxu0
    %v358 = vadd.f32 %v227, %v357
    %v359 = vpop.f32.mrb[0].mxu0
    %v360 = vadd.f32 %v231, %v359
    %v361 = vpop.f32.mrb[0].mxu0
    %v362 = vadd.f32 %v227, %v361
    %v363 = vpop.f32.mrb[0].mxu0
    %v364 = vadd.f32 %v231, %v363
    %365 = vdwg.mxu0
    %366 = vst [vmem:[#allocation9] sm:$0xff] %v315
    %367 = vst [vmem:[#allocation9 + $0x8] sm:$0xff] %v317
    %368 = vst [vmem:[#allocation9 + $0x10] sm:$0xff] %v358
    %369 = vst [vmem:[#allocation9 + $0x18] sm:$0xff] %v360
    %370 = vst [vmem:[#allocation9 + $0x20] sm:$0xff] %v319
    %371 = vst [vmem:[#allocation9 + $0x28] sm:$0xff] %v321
    %372 = vst [vmem:[#allocation9 + $0x30] sm:$0xff] %v362
    %373 = vst [vmem:[#allocation9 + $0x38] sm:$0xff] %v364
    // Predicated region
    $region46: #{tpu_custom_call.1} parent=1 // pred_check
      _
    $region47: #{tpu_custom_call.1} parent=1 // pred_check_branch
      %375 = sbr.rel (0) target = $region49
    $region48: #{tpu_custom_call.1} parent=1 // pred_region
      %s377 = ssub.s32 1024, 1024
      %378 = vsyncadd [#allocation5], %s377
      %s379 = sshll.u32 [#allocation9], 4
      %s380 = int_to_ptr.vmem [resolvable:$true] %s379
      %385 = dma.vmem_to_hbm [thread:$0]  %s380, 1024, %s7, [#allocation5], 512, 512, 32
    $region49: #{tpu_custom_call.1} parent=1 // pred_fallthru
      _
    // Predicated region
    $region50: #{tpu_custom_call.1} parent=1 // pred_check
      _
    $region51: #{tpu_custom_call.1} parent=1 // pred_check_branch
      %387 = sbr.rel (0) target = $region53
    $region52: #{tpu_custom_call.1} parent=1 // pred_region
      %388 = dma.done [#allocation5], 1024
    $region53: #{tpu_custom_call.1} parent=1 // pred_fallthru
      _
    %389 = vsyncpa [#allocation4], 1
    %390 = vsyncpa [#allocation7], 1
    %391 = vsyncpa [#allocation5], 1

</llo_original>
